<compile_context>
chip_gen: v6e
topology: v6e:2x2x1
jax: 0.10.0
libtpu: 0.0.40
codegen_flags: <defaults>
</compile_context>

<pallas_src>
import numpy as np
import jax
import jax.numpy as jnp
from jax.experimental import pallas as pl
from jax.experimental.pallas import tpu as pltpu


def _round_up(x, m):
    return ((x + m - 1) // m) * m


# ----------------------------------------------------------------------------
# Kernel 1: model forward over the whole dataset (Linear(D,1) + sigmoid).
#   xt: [D, TN]  w: [D, 1]  b: [1, 1]  ->  o: [1, TN]   (lane-dense output)
#   VPU multiply + sublane reduce; no MXU, no [M,1] masked stores.
# ----------------------------------------------------------------------------
def _linear_sigmoid_kernel(xt_ref, w_ref, b_ref, o_ref):
    z = jnp.sum(xt_ref[...] * w_ref[...], axis=0, keepdims=True) + b_ref[...]
    o_ref[...] = jax.nn.sigmoid(z)


def model_forward_all(x_t, w, b, tn):
    d, n_pad = x_t.shape
    return pl.pallas_call(
        _linear_sigmoid_kernel,
        out_shape=jax.ShapeDtypeStruct((1, n_pad), jnp.float32),
        grid_spec=pltpu.PrefetchScalarGridSpec(
            num_scalar_prefetch=0,
            grid=(n_pad // tn,),
            in_specs=[
                pl.BlockSpec((d, tn), lambda i: (0, i)),
                pl.BlockSpec((d, 1), lambda i: (0, 0)),
                pl.BlockSpec((1, 1), lambda i: (0, 0)),
            ],
            out_specs=pl.BlockSpec((1, tn), lambda i: (0, i)),
        ),
        compiler_params=pltpu.CompilerParams(
            dimension_semantics=("parallel",)),
    )(x_t, w, b)


# ----------------------------------------------------------------------------
# Kernel 2: fused reductions (one pallas_call, three scalar-ish outputs).
#   - per sensitive class c: sum_p pair_w[c,p] * (pos[c,p] - neg[c,p])^2,
#     pair axis tiled; partial sums kept in a [G, TP] f32 VMEM scratch and
#     cross-lane reduced only at the final grid step.
#   - BCE sum (log clamped at -100, torch semantics) over the padded batch.
#   - L2 sum of squares of the model parameters (w, b).
# ----------------------------------------------------------------------------
def _fused_reduce_kernel(pv_ref, nv_ref, pw_ref, yp_ref, yt_ref, bm_ref,
                         w_ref, b_ref, ps_ref, bce_ref, l2_ref, acc_ref):
    k = pl.program_id(0)

    @pl.when(k == 0)
    def _():
        acc_ref[...] = jnp.zeros_like(acc_ref)
        p = yp_ref[...]
        t = yt_ref[...]
        logp = jnp.maximum(jnp.log(p), -100.0)
        log1mp = jnp.maximum(jnp.log(1.0 - p), -100.0)
        bce_ref[0, 0] = jnp.sum(bm_ref[...] * -(t * logp + (1.0 - t) * log1mp))
        l2_ref[0, 0] = (jnp.sum(w_ref[...] * w_ref[...])
                        + jnp.sum(b_ref[...] * b_ref[...]))

    d = pv_ref[...] - nv_ref[...]
    acc_ref[...] += pw_ref[...] * (d * d)

    @pl.when(k == pl.num_programs(0) - 1)
    def _():
        ps_ref[...] = jnp.sum(acc_ref[...], axis=1, keepdims=True)


def fused_reductions(pos_vals, neg_vals, pair_w, yp, yt, bm, w, b, tp):
    g, maxp = pos_vals.shape
    d = w.shape[0]
    b_pad = yp.shape[1]
    return pl.pallas_call(
        _fused_reduce_kernel,
        out_shape=(
            jax.ShapeDtypeStruct((g, 1), jnp.float32),
            jax.ShapeDtypeStruct((1, 1), jnp.float32),
            jax.ShapeDtypeStruct((1, 1), jnp.float32),
        ),
        grid_spec=pltpu.PrefetchScalarGridSpec(
            num_scalar_prefetch=0,
            grid=(maxp // tp,),
            in_specs=[
                pl.BlockSpec((g, tp), lambda k: (0, k)),
                pl.BlockSpec((g, tp), lambda k: (0, k)),
                pl.BlockSpec((g, tp), lambda k: (0, k)),
                pl.BlockSpec((1, b_pad), lambda k: (0, 0)),
                pl.BlockSpec((1, b_pad), lambda k: (0, 0)),
                pl.BlockSpec((1, b_pad), lambda k: (0, 0)),
                pl.BlockSpec((d, 1), lambda k: (0, 0)),
                pl.BlockSpec((1, 1), lambda k: (0, 0)),
            ],
            out_specs=[
                pl.BlockSpec((g, 1), lambda k: (0, 0)),
                pl.BlockSpec((1, 1), lambda k: (0, 0)),
                pl.BlockSpec((1, 1), lambda k: (0, 0)),
            ],
            scratch_shapes=[pltpu.VMEM((g, tp), jnp.float32)],
        ),
        compiler_params=pltpu.CompilerParams(
            dimension_semantics=("arbitrary",)),
    )(pos_vals, neg_vals, pair_w, yp, yt, bm, w, b)


# ----------------------------------------------------------------------------
# Forward pass of MulticlassGroupFairnessLoss ('ovr' averaging)
# ----------------------------------------------------------------------------
def multiclass_group_fairness_loss(
    y_pred, y_true, features, sensitive, y_col, w, b,
    fairness_lambda=1.0, L2_gamma=0.0, average="ovr", rng=None,
):
    """features: np.ndarray [N, D] (dataset minus 'y' and sensitive columns)
    sensitive:   np.ndarray [N, G] 0/1 group-indicator columns
    y_col:       np.ndarray [N]    dataset target column 'y'
    """
    if rng is None:
        rng = np.random.default_rng(0)
    if average == "ovo":
        # TODO(synk): 'ovo' pairing uses the identical sparse-pair kernel path
        # over (c1==1, c2==1) splits; only 'ovr' is exercised in this script.
        raise NotImplementedError("only 'ovr' implemented in this script")
    if average != "ovr":
        raise ValueError('multiclass must be "ovr" or "ovo"')

    n, d_feat = features.shape
    g = sensitive.shape[1]

    # ---- host side: sparse selected-pair construction, O(min(P,N)) per class.
    # (pandas/np.random.choice glue stays host-side as in the reference; no
    #  dense [P, N] mask is ever materialized or moved to the device.)
    class_weight = np.zeros((g,), np.float32)
    inv_two_min = np.zeros((g,), np.float32)
    per_class = [None] * g
    maxp_raw = 1
    if fairness_lambda > 0:
        for c in range(g):
            pos_idx = np.where(sensitive[:, c] == 1)[0]
            neg_idx = np.where(sensitive[:, c] == 0)[0]
            pos_len, neg_len = len(pos_idx), len(neg_idx)
            if min(pos_len, neg_len) == 0:
                continue
            n_sel = 2 * min(pos_len, neg_len)
            selected = rng.choice(pos_len * neg_len, n_sel, replace=False)
            gi = pos_idx[selected // neg_len]
            gj = neg_idx[selected % neg_len]
            wts = (np.asarray(y_col)[gi] == np.asarray(y_col)[gj]).astype(np.float32)
            per_class[c] = (gi.astype(np.int32), gj.astype(np.int32), wts)
            class_weight[c] = pos_len
            inv_two_min[c] = 1.0 / (2 * min(pos_len, neg_len))
            maxp_raw = max(maxp_raw, n_sel)

    tp = min(_round_up(maxp_raw, 128), 512)
    maxp = _round_up(maxp_raw, tp)
    pair_i = np.zeros((g, maxp), np.int32)
    pair_j = np.zeros((g, maxp), np.int32)
    pair_w = np.zeros((g, maxp), np.float32)
    for c in range(g):
        if per_class[c] is None:
            continue
        gi, gj, wts = per_class[c]
        pair_i[c, : gi.shape[0]] = gi
        pair_j[c, : gj.shape[0]] = gj
        pair_w[c, : wts.shape[0]] = wts

    # ---- model forward ONCE over the full dataset, lane-dense [1, N_pad] ----
    tn_cap = max(128, (8 * 1024 * 1024 // (max(d_feat, 1) * 8)) // 128 * 128)
    tn = min(_round_up(n, 128), 1024, tn_cap)
    n_pad = _round_up(n, tn)
    x_t = np.zeros((d_feat, n_pad), np.float32)
    x_t[:, :n] = np.asarray(features, np.float32).T
    outputs = model_forward_all(jnp.asarray(x_t), w, b, tn)[0]     # [n_pad]

    # cheap XLA gather of the O(#pairs) selected outputs (padded pairs -> row 0,
    # weight 0, so they contribute nothing)
    pos_vals = outputs[jnp.asarray(pair_i)]
    neg_vals = outputs[jnp.asarray(pair_j)]

    # ---- BCE operands padded to a lane-dense [1, 128k] tile ----
    bsz = int(np.asarray(jax.ShapeDtypeStruct(y_pred.shape, y_pred.dtype).shape)[0]) \
        if hasattr(y_pred, "shape") else len(y_pred)
    bsz = int(y_pred.shape[0])
    b_pad = _round_up(max(bsz, 1), 128)
    yp = jnp.pad(jnp.asarray(y_pred, jnp.float32).reshape(1, -1),
                 ((0, 0), (0, b_pad - bsz)), constant_values=0.5)
    yt = jnp.pad(jnp.asarray(y_true, jnp.float32).reshape(1, -1),
                 ((0, 0), (0, b_pad - bsz)))
    bm = jnp.pad(jnp.ones((1, bsz), jnp.float32), ((0, 0), (0, b_pad - bsz)))

    # ---- one fused kernel: per-class pair sums + BCE sum + L2 sum ----
    pair_sums, bce_sum, l2_sum = fused_reductions(
        pos_vals, neg_vals, jnp.asarray(pair_w), yp, yt, bm, w, b, tp)

    # ---- tiny on-device scalar combine (no per-class host round trips) ----
    total_w = float(class_weight.sum())
    if fairness_lambda > 0 and total_w > 0:
        c_scaled = fairness_lambda * (
            pair_sums[:, 0] * jnp.asarray(inv_two_min)) ** 2
        scaled_fairness_loss = (
            jnp.sum(jnp.asarray(class_weight) * c_scaled) / total_w)
    else:
        scaled_fairness_loss = jnp.float32(0.0)

    bce = bce_sum[0, 0] / bsz
    L2_penalty = L2_gamma * l2_sum[0, 0]
    return bce + scaled_fairness_loss + L2_penalty


if __name__ == "__main__":
    key = jax.random.PRNGKey(0)
    k1, k2, k3, k4, k5, k6 = jax.random.split(key, 6)

    N, D, G, B = 16, 8, 2, 8  # dataset rows, feature dim, sensitive groups, batch

    # deterministic "model" parameters: Linear(D, 1) + sigmoid
    w = (jax.random.normal(k1, (D, 1), dtype=jnp.float32) * 0.1).astype(jnp.float32)
    b = jnp.zeros((1, 1), dtype=jnp.float32)

    # synthetic "dataset": features, one-hot sensitive group columns, target y
    feats = np.asarray(jax.random.normal(k2, (N, D)), dtype=np.float32)
    group = np.asarray(jax.random.bernoulli(k3, 0.5, (N,))).astype(np.int32)
    sensitive = np.stack([group == 0, group == 1], axis=1).astype(np.int32)
    y_col = np.asarray(jax.random.bernoulli(k4, 0.5, (N,))).astype(np.int32)

    # training-batch predictions / targets for the BCE term
    y_pred = jnp.clip(
        jax.random.uniform(k5, (B,), dtype=jnp.float32), 1e-4, 1.0 - 1e-4)
    y_true = jax.random.bernoulli(k6, 0.5, (B,)).astype(jnp.float32)

    rng = np.random.default_rng(0)
    loss = multiclass_group_fairness_loss(
        y_pred, y_true, feats, sensitive, y_col, w, b,
        fairness_lambda=1.0, L2_gamma=0.01, average="ovr", rng=rng,
    )
    jax.block_until_ready(loss)
    assert np.isfinite(np.asarray(loss)).all()
    print("KERNEL_OK")
</pallas_src>

<mosaic_0001>
module attributes {stable_mosaic.version = 11 : i64} {
  func.func @_linear_sigmoid_kernel(%arg0: i32, %arg1: memref<8x128xf32, #tpu.memory_space<vmem>>, %arg2: memref<8x1xf32, #tpu.memory_space<vmem>>, %arg3: memref<1x1xf32, #tpu.memory_space<vmem>>, %arg4: memref<1x128xf32, #tpu.memory_space<vmem>>) attributes {dimension_semantics = [#tpu.dimension_semantics<parallel>], iteration_bounds = array<i64: 1>, scalar_prefetch = 0 : i64, scratch_operands = 0 : i64, tpu.core_type = #tpu.core_type<tc>, window_params = [{transform_indices = @transform_0, window_bounds = array<i64: 8, 128>}, {pipeline_mode = #tpu.pipeline_mode<synchronous>, transform_indices = @transform_1, window_bounds = array<i64: 8, 1>}, {pipeline_mode = #tpu.pipeline_mode<synchronous>, transform_indices = @transform_2, window_bounds = array<i64: 1, 1>}, {transform_indices = @transform_3, window_bounds = array<i64: 1, 128>}]} {
    %c0 = arith.constant 0 : index
    %c0_0 = arith.constant 0 : index
    %0 = vector.load %arg1[%c0, %c0_0] : memref<8x128xf32, #tpu.memory_space<vmem>>, vector<8x128xf32>
    %c0_1 = arith.constant 0 : index
    %c0_2 = arith.constant 0 : index
    %1 = vector.load %arg2[%c0_1, %c0_2] : memref<8x1xf32, #tpu.memory_space<vmem>>, vector<8x1xf32>
    %2 = vector.broadcast %1 : vector<8x1xf32> to vector<8x128xf32>
    %3 = arith.mulf %0, %2 : vector<8x128xf32>
    %cst = arith.constant dense<0.000000e+00> : vector<128xf32>
    %4 = vector.multi_reduction <add>, %3, %cst [0] : vector<8x128xf32> to vector<128xf32>
    %5 = vector.shape_cast %4 : vector<128xf32> to vector<1x128xf32>
    %c0_3 = arith.constant 0 : index
    %c0_4 = arith.constant 0 : index
    %6 = vector.load %arg3[%c0_3, %c0_4] : memref<1x1xf32, #tpu.memory_space<vmem>>, vector<1x1xf32>
    %7 = vector.broadcast %6 : vector<1x1xf32> to vector<1x128xf32>
    %8 = arith.addf %5, %7 : vector<1x128xf32>
    %9 = arith.negf %8 : vector<1x128xf32>
    %10 = math.exp %9 : vector<1x128xf32>
    %cst_5 = arith.constant 1.000000e+00 : f32
    %11 = vector.broadcast %cst_5 : f32 to vector<1x128xf32>
    %12 = arith.addf %11, %10 : vector<1x128xf32>
    %13 = arith.divf %11, %12 : vector<1x128xf32>
    %c0_6 = arith.constant 0 : index
    %c0_7 = arith.constant 0 : index
    %14 = vector.load %arg4[%c0_6, %c0_7] : memref<1x128xf32, #tpu.memory_space<vmem>>, vector<1x128xf32>
    tpu.vector_store %arg4[%c0_6, %c0_7], %13 {strides = array<i32>} : memref<1x128xf32, #tpu.memory_space<vmem>>, vector<1x128xf32>,
    return
  }
  func.func @transform_0(%arg0: i32) -> (i32, i32) {
    %c0_i32 = arith.constant 0 : i32
    %c0_i32_0 = arith.constant 0 : i32
    return %c0_i32, %arg0 : i32, i32
  }
  func.func @transform_1(%arg0: i32) -> (i32, i32) {
    %c0_i32 = arith.constant 0 : i32
    %c0_i32_0 = arith.constant 0 : i32
    %c0_i32_1 = arith.constant 0 : i32
    return %c0_i32, %c0_i32_0 : i32, i32
  }
  func.func @transform_2(%arg0: i32) -> (i32, i32) {
    %c0_i32 = arith.constant 0 : i32
    %c0_i32_0 = arith.constant 0 : i32
    %c0_i32_1 = arith.constant 0 : i32
    return %c0_i32, %c0_i32_0 : i32, i32
  }
  func.func @transform_3(%arg0: i32) -> (i32, i32) {
    %c0_i32 = arith.constant 0 : i32
    %c0_i32_0 = arith.constant 0 : i32
    return %c0_i32, %arg0 : i32, i32
  }
}

</mosaic_0001>

<llo_original>
// kernel: tpu_custom_call.1
$region0: #{tpu_custom_call.1}
  #allocation0 [shape = 'u32[]', space=smem, size = 0x4, offset = 0x4, fixed_abs, tag = 'smem constant byte address 0x4 - core index']
  #allocation1 [shape = 'u32[144,128]{1,0:T(1,128)}', space=vmem, size = 0x12000, scoped, tag = 'internal scratch']
  #allocation2 [shape = 'f32[1,1]{1,0:T(1,128)S(1)}', space=vmem, size = 0x200, scoped, tag = 'scoped memory for tpu_custom_call.1']
  %s0 = inlined_call_operand.vmem [shape: f32[8,128], index: 0, kind: input, shape index: {}]
  %s1 = inlined_call_operand.vmem [shape: f32[8,1], index: 1, kind: input, shape index: {}]
  %s2 = inlined_call_operand.<no memory space> [shape: f32[1,1], index: 2, kind: input, shape index: {}]
  %s3 = inlined_call_operand.hbm [shape: f32[1,128], index: 3, kind: output, shape index: {}]
  %s4 = sld [smem:[#allocation0]]
  $region22: #{tpu_custom_call.1} parent=0
    _
  %s6 = ssub.s32 1, %s4
  %s7 = scalar_select 0, %s6, %s4
  %v8 = vstv %s2
  %9 = vst [vmem:[#allocation2] sm:$0x1] %v8
  $region1: #{tpu_custom_call.1} parent=0
    #allocation3 [shape = 'u8[512]{0}', space=vmem, size = 0x400, scoped, tag = 'output window, operand 0, single buffered']
    #allocation4 [shape = 's32[1]{0}', space=sflag, size = 0x4, scoped, tag = 'scoped memory for tpu_custom_call.1']
    %10 = vsyncpa [#allocation4], 0
    // Predicated region
    $region2: #{tpu_custom_call.1} parent=1 // pred_check
      _
    $region3: #{tpu_custom_call.1} parent=1 // pred_check_branch
      %12 = sbr.rel (0) target = $region5
    $region4: #{tpu_custom_call.1} parent=1 // pred_region
      _
    $region5: #{tpu_custom_call.1} parent=1 // pred_fallthru
      _
    // Predicated region
    $region6: #{tpu_custom_call.1} parent=1 // pred_check
      _
    $region7: #{tpu_custom_call.1} parent=1 // pred_check_branch
      %14 = sbr.rel (0) target = $region9
    $region8: #{tpu_custom_call.1} parent=1 // pred_region
      _
    $region9: #{tpu_custom_call.1} parent=1 // pred_fallthru
      _
    // Predicated region
    $region10: #{tpu_custom_call.1} parent=1 // pred_check
      _
    $region11: #{tpu_custom_call.1} parent=1 // pred_check_branch
      %16 = sbr.rel (0) target = $region13
    $region12: #{tpu_custom_call.1} parent=1 // pred_region
      _
    $region13: #{tpu_custom_call.1} parent=1 // pred_fallthru
      _
    %v17 = vld [vmem:[%s0] sm:$0xff]
    %v18 = vld [vmem:[%s1] sm:$0xff]
    %20 = vset.pattern.permute.xlu0 0
    %21 = vperm.xlu0 %20, %v18
    %v22 = vpop.permute.xlu0 %21
    %v24 = vmul.f32 %v17, %v22
    %v25 = vrot.slane %v24, 4
    %v26 = vadd.f32 %v24, %v25
    %v27 = vrot.slane %v26, 2
    %v28 = vadd.f32 %v26, %v27
    %v29 = vrot.slane %v28, 1
    %v30 = vadd.f32 %v28, %v29
    %v31 = vld [vmem:[#allocation2] sm:$0x1]
    %33 = vset.pattern.permute.xlu0 0
    %34 = vperm.xlu0 %33, %v31
    %v35 = vpop.permute.xlu0 %34
    %v37 = vlaneseq
    %v38 = vshrl.u32 %v37, 7
    %v39 = vsub.s32 0, %v38
    %v40 = vrot.slane %v35, %v39
    %v41 = vadd.f32 %v30, %v40
    %v42 = vxor.u32 %v41, 2147483648
    %v43 = vmul.f32 %v42, 1.442695
    %v44 = vpow.pop %v43
    %v45 = vadd.f32 %v44, 1.0
    %v46 = vrcp.pop %v45
    %v47 = vmul.f32 1.0, %v46
    %48 = vst [vmem:[#allocation3] sm:$0x1] %v47
    // Predicated region
    $region14: #{tpu_custom_call.1} parent=1 // pred_check
      _
    $region15: #{tpu_custom_call.1} parent=1 // pred_check_branch
      %50 = sbr.rel (0) target = $region17
    $region16: #{tpu_custom_call.1} parent=1 // pred_region
      %s52 = ssub.s32 16, 16
      %53 = vsyncadd [#allocation4], %s52
      %s55 = sshll.u32 [#allocation3], 4
      %s56 = int_to_ptr.vmem [resolvable:$true] %s55
      %58 = dma.vmem_to_hbm [thread:$0]  %s56, 16, %s3, [#allocation4]
    $region17: #{tpu_custom_call.1} parent=1 // pred_fallthru
      _
    // Predicated region
    $region18: #{tpu_custom_call.1} parent=1 // pred_check
      _
    $region19: #{tpu_custom_call.1} parent=1 // pred_check_branch
      %60 = sbr.rel (0) target = $region21
    $region20: #{tpu_custom_call.1} parent=1 // pred_region
      %61 = dma.done [#allocation4], 16
    $region21: #{tpu_custom_call.1} parent=1 // pred_fallthru
      _
    %62 = vsyncpa [#allocation4], 1

</llo_original>
